<compile_context>
chip_gen: v6e
topology: v6e:2x2x1
jax: 0.10.0
libtpu: 0.0.40
codegen_flags: <defaults>
</compile_context>

<pallas_src>
import functools

import jax
import jax.numpy as jnp
import numpy as np
from jax.experimental import pallas as pl
from jax.experimental.pallas import tpu as pltpu

# ---- problem sizes (small, TPU-tile friendly) -------------------------------
R = 8            # irrep size
MX = 16          # input multiplicity  -> din  = 128
MW = 16          # output multiplicity -> dout = 128
DIN = MX * R
DOUT = MW * R
WDIM = MW * MX   # bi_params dimension (one scalar per (out-copy, in-copy))
B = 16           # batch (single grid step: whole batch in one tile)


# ---- Pallas kernel: one MXU matmul + one elementwise VPU multiply ------------
def bilinear_kernel(x_ref, pexp_ref, out_ref):
    x = x_ref[...]                                            # (B, DIN) f32
    # Bilinear elements, flattened to (B, DOUT):
    #   wflat[b, w*R+i] = sum_m P[w, m] * x[b, m*R+i]
    # Keep operands f32: at 16x128x128 the MXU is nowhere near the bottleneck,
    # and f32 elementwise is required for the v5e VPU anyway.
    wflat = jnp.dot(x, pexp_ref[...], preferred_element_type=jnp.float32)  # (B, DOUT)

    # (W @ x)[b, w*R+i] = wflat[b, w*R+i] * x[b, (w % MX)*R + i]
    if MW == MX:
        x_sel = x                                             # copy index w % MX == w
    else:
        # General case: replicate the MX input copies across the MW output
        # copies with a static tile pattern (no gather, no dense W).
        reps = -(-MW // MX)
        x_sel = jnp.tile(x.reshape(x.shape[0], MX, R), (1, reps, 1))[:, :MW, :]
        x_sel = x_sel.reshape(x.shape[0], DOUT)

    out_ref[...] = (0.1 * wflat * x_sel).astype(out_ref.dtype)


@functools.partial(jax.jit, static_argnames=())
def bilinear_forward(bi_params, x):
    """BiLinear.forward(x): 0.1 * (weight_proj(bi_params, x) @ x[...,None])[...,0]."""
    # Parameter setup glue (plain JAX): expand params into the (din, dout)
    # projection used to form the bilinear elements with one MXU matmul.
    P = bi_params.reshape(MW, MX).astype(jnp.float32)
    # Pexp[m*R + j, w*R + i] = P[w, m] * (i == j)
    pexp = jnp.einsum("wm,ji->mjwi", P, jnp.eye(R, dtype=jnp.float32)).reshape(DIN, DOUT)

    return pl.pallas_call(
        bilinear_kernel,
        out_shape=jax.ShapeDtypeStruct((B, DOUT), jnp.float32),
        grid=(1,),
        in_specs=[
            pl.BlockSpec((B, DIN), lambda i: (0, 0)),
            pl.BlockSpec((DIN, DOUT), lambda i: (0, 0)),
        ],
        out_specs=pl.BlockSpec((B, DOUT), lambda i: (0, 0)),
        compiler_params=pltpu.CompilerParams(dimension_semantics=("parallel",)),
    )(x, pexp)


# ---- pure-JAX reference (same synthetic weight_proj; dense W scatter) --------
def reference_forward(bi_params, x):
    P = bi_params.reshape(MW, MX).astype(jnp.float32)
    xb = x.reshape(B, MX, R)
    wblk = jnp.einsum("wm,bmr->bwr", P, xb)                   # (B, MW, R)
    W = jnp.zeros((B, DOUT, DIN), jnp.float32)
    for w in range(MW):
        for i in range(R):
            W = W.at[:, w * R + i, (w % MX) * R + i].set(wblk[:, w, i])
    return 0.1 * jnp.einsum("boc,bc->bo", W, x)               # (B, DOUT)


if __name__ == "__main__":
    key = jax.random.PRNGKey(0)
    kp, kx = jax.random.split(key)
    # bi_params ~ torch.randn(Wdim), deterministic via PRNGKey(0)
    bi_params = jax.random.normal(kp, (WDIM,), dtype=jnp.float32)
    x = jax.random.normal(kx, (B, DIN), dtype=jnp.float32)

    out = bilinear_forward(bi_params, x)
    out = jax.block_until_ready(out)

    ref = reference_forward(bi_params, x)
    np.testing.assert_allclose(np.asarray(out), np.asarray(ref), rtol=1e-5, atol=1e-5)

    print("KERNEL_OK")
</pallas_src>

<mosaic_0001>
module attributes {stable_mosaic.version = 11 : i64} {
  func.func @bilinear_kernel(%arg0: i32, %arg1: memref<16x128xf32, #tpu.memory_space<vmem>>, %arg2: memref<128x128xf32, #tpu.memory_space<vmem>>, %arg3: memref<16x128xf32, #tpu.memory_space<vmem>>) attributes {dimension_semantics = [#tpu.dimension_semantics<parallel>], iteration_bounds = array<i64: 1>, scalar_prefetch = 0 : i64, scratch_operands = 0 : i64, tpu.core_type = #tpu.core_type<tc>, window_params = [{pipeline_mode = #tpu.pipeline_mode<synchronous>, transform_indices = @transform_0, window_bounds = array<i64: 16, 128>}, {pipeline_mode = #tpu.pipeline_mode<synchronous>, transform_indices = @transform_1, window_bounds = array<i64: 128, 128>}, {pipeline_mode = #tpu.pipeline_mode<synchronous>, transform_indices = @transform_2, window_bounds = array<i64: 16, 128>}]} {
    %c0 = arith.constant 0 : index
    %c0_0 = arith.constant 0 : index
    %0 = vector.load %arg1[%c0, %c0_0] : memref<16x128xf32, #tpu.memory_space<vmem>>, vector<16x128xf32>
    %c0_1 = arith.constant 0 : index
    %c0_2 = arith.constant 0 : index
    %1 = vector.load %arg2[%c0_1, %c0_2] : memref<128x128xf32, #tpu.memory_space<vmem>>, vector<128x128xf32>
    %cst = arith.constant dense<0.000000e+00> : vector<16x128xf32>
    %2 = tpu.matmul %0, %1, %cst {dimension_numbers = #tpu.dot_dimension_numbers<[1], [0], [0], [1], [0, 0, 1, 1], [], []>} : vector<16x128xf32>, vector<128x128xf32>, vector<16x128xf32> -> vector<16x128xf32>
    %cst_3 = arith.constant 1.000000e-01 : f32
    %3 = vector.broadcast %cst_3 : f32 to vector<16x128xf32>
    %4 = arith.mulf %3, %2 : vector<16x128xf32>
    %5 = arith.mulf %4, %0 : vector<16x128xf32>
    %c0_4 = arith.constant 0 : index
    %c0_5 = arith.constant 0 : index
    %6 = vector.load %arg3[%c0_4, %c0_5] : memref<16x128xf32, #tpu.memory_space<vmem>>, vector<16x128xf32>
    tpu.vector_store %arg3[%c0_4, %c0_5], %5 {strides = array<i32>} : memref<16x128xf32, #tpu.memory_space<vmem>>, vector<16x128xf32>,
    return
  }
  func.func @transform_0(%arg0: i32) -> (i32, i32) {
    %c0_i32 = arith.constant 0 : i32
    %c0_i32_0 = arith.constant 0 : i32
    %c0_i32_1 = arith.constant 0 : i32
    return %c0_i32, %c0_i32_0 : i32, i32
  }
  func.func @transform_1(%arg0: i32) -> (i32, i32) {
    %c0_i32 = arith.constant 0 : i32
    %c0_i32_0 = arith.constant 0 : i32
    %c0_i32_1 = arith.constant 0 : i32
    return %c0_i32, %c0_i32_0 : i32, i32
  }
  func.func @transform_2(%arg0: i32) -> (i32, i32) {
    %c0_i32 = arith.constant 0 : i32
    %c0_i32_0 = arith.constant 0 : i32
    %c0_i32_1 = arith.constant 0 : i32
    return %c0_i32, %c0_i32_0 : i32, i32
  }
}

</mosaic_0001>

<llo_original>
// kernel: bilinear_forward.1
$region0: #{bilinear_forward.1}
  #allocation0 [shape = 'u32[]', space=smem, size = 0x4, offset = 0x4, fixed_abs, tag = 'smem constant byte address 0x4 - core index']
  #allocation1 [shape = 'u32[144,128]{1,0:T(1,128)}', space=vmem, size = 0x12000, scoped, tag = 'internal scratch']
  %s0 = inlined_call_operand.vmem [shape: f32[16,128], index: 0, kind: input, shape index: {}]
  %s1 = inlined_call_operand.vmem [shape: f32[128,128], index: 1, kind: input, shape index: {}]
  %s2 = inlined_call_operand.hbm [shape: f32[16,128], index: 2, kind: output, shape index: {}]
  %s3 = sld [smem:[#allocation0]]
  $region18: #{bilinear_forward.1} parent=0
    _
  %s5 = ssub.s32 1, %s3
  %s6 = scalar_select 0, %s5, %s3
  $region1: #{bilinear_forward.1} parent=0
    #allocation2 [shape = 'u8[8192]{0}', space=vmem, size = 0x2000, scoped, tag = 'output window, operand 0, single buffered']
    #allocation3 [shape = 's32[1]{0}', space=sflag, size = 0x4, scoped, tag = 'scoped memory for bilinear_forward.1']
    %7 = vsyncpa [#allocation3], 0
    // Predicated region
    $region2: #{bilinear_forward.1} parent=1 // pred_check
      _
    $region3: #{bilinear_forward.1} parent=1 // pred_check_branch
      %9 = sbr.rel (0) target = $region5
    $region4: #{bilinear_forward.1} parent=1 // pred_region
      _
    $region5: #{bilinear_forward.1} parent=1 // pred_fallthru
      _
    // Predicated region
    $region6: #{bilinear_forward.1} parent=1 // pred_check
      _
    $region7: #{bilinear_forward.1} parent=1 // pred_check_branch
      %11 = sbr.rel (0) target = $region9
    $region8: #{bilinear_forward.1} parent=1 // pred_region
      _
    $region9: #{bilinear_forward.1} parent=1 // pred_fallthru
      _
    %v12 = vld [vmem:[%s0] sm:$0xff]
    %v13 = vld [vmem:[%s0 + $0x8] sm:$0xff]
    %v14 = vld [vmem:[%s1] sm:$0xff]
    %v15 = vld [vmem:[%s1 + $0x8] sm:$0xff]
    %v16 = vld [vmem:[%s1 + $0x10] sm:$0xff]
    %v17 = vld [vmem:[%s1 + $0x18] sm:$0xff]
    %v18 = vld [vmem:[%s1 + $0x20] sm:$0xff]
    %v19 = vld [vmem:[%s1 + $0x28] sm:$0xff]
    %v20 = vld [vmem:[%s1 + $0x30] sm:$0xff]
    %v21 = vld [vmem:[%s1 + $0x38] sm:$0xff]
    %v22 = vld [vmem:[%s1 + $0x40] sm:$0xff]
    %v23 = vld [vmem:[%s1 + $0x48] sm:$0xff]
    %v24 = vld [vmem:[%s1 + $0x50] sm:$0xff]
    %v25 = vld [vmem:[%s1 + $0x58] sm:$0xff]
    %v26 = vld [vmem:[%s1 + $0x60] sm:$0xff]
    %v27 = vld [vmem:[%s1 + $0x68] sm:$0xff]
    %v28 = vld [vmem:[%s1 + $0x70] sm:$0xff]
    %v29 = vld [vmem:[%s1 + $0x78] sm:$0xff]
    %30 = vmatprep.subr.mxu0 0.0
    %31 = vmatpush1.msra.mxu0 %v29
    %32 = vmatprep.subr.mxu0 0.0
    %33 = vmatpush1.msra.mxu0 %v28
    %34 = vmatprep.subr.mxu0 0.0
    %35 = vmatpush1.msra.mxu0 %v27
    %36 = vmatprep.subr.mxu0 0.0
    %37 = vmatpush1.msra.mxu0 %v26
    %38 = vmatprep.subr.mxu0 0.0
    %39 = vmatpush1.msra.mxu0 %v25
    %40 = vmatprep.subr.mxu0 0.0
    %41 = vmatpush1.msra.mxu0 %v24
    %42 = vmatprep.subr.mxu0 0.0
    %43 = vmatpush1.msra.mxu0 %v23
    %44 = vmatprep.subr.mxu0 0.0
    %45 = vmatpush1.msra.mxu0 %v22
    %46 = vmatprep.subr.mxu0 0.0
    %47 = vmatpush1.msra.mxu0 %v21
    %48 = vmatprep.subr.mxu0 0.0
    %49 = vmatpush1.msra.mxu0 %v20
    %50 = vmatprep.subr.mxu0 0.0
    %51 = vmatpush1.msra.mxu0 %v19
    %52 = vmatprep.subr.mxu0 0.0
    %53 = vmatpush1.msra.mxu0 %v18
    %54 = vmatprep.subr.mxu0 0.0
    %55 = vmatpush1.msra.mxu0 %v17
    %56 = vmatprep.subr.mxu0 0.0
    %57 = vmatpush1.msra.mxu0 %v16
    %58 = vmatprep.subr.mxu0 0.0
    %59 = vmatpush1.msra.mxu0 %v15
    %60 = vmatprep.subr.mxu0 0.0
    %61 = vmatpush1.msra.mxu0 %v14
    %62 = vmatprep.subr.mxu0 0.0
    %63 = vmatpush2.msra.mxu0 0.0
    %64 = vmatprep.subr.mxu0 0.0
    %65 = vmatpush2.msra.mxu0 0.0
    %66 = vmatprep.subr.mxu0 0.0
    %67 = vmatpush2.msra.mxu0 0.0
    %68 = vmatprep.subr.mxu0 0.0
    %69 = vmatpush2.msra.mxu0 0.0
    %70 = vmatprep.subr.mxu0 0.0
    %71 = vmatpush2.msra.mxu0 0.0
    %72 = vmatprep.subr.mxu0 0.0
    %73 = vmatpush2.msra.mxu0 0.0
    %74 = vmatprep.subr.mxu0 0.0
    %75 = vmatpush2.msra.mxu0 0.0
    %76 = vmatprep.subr.mxu0 0.0
    %77 = vmatpush2.msra.mxu0 0.0
    %78 = vmatprep.subr.mxu0 0.0
    %79 = vmatpush2.msra.mxu0 0.0
    %80 = vmatprep.subr.mxu0 0.0
    %81 = vmatpush2.msra.mxu0 0.0
    %82 = vmatprep.subr.mxu0 0.0
    %83 = vmatpush2.msra.mxu0 0.0
    %84 = vmatprep.subr.mxu0 0.0
    %85 = vmatpush2.msra.mxu0 0.0
    %86 = vmatprep.subr.mxu0 0.0
    %87 = vmatpush2.msra.mxu0 0.0
    %88 = vmatprep.subr.mxu0 0.0
    %89 = vmatpush2.msra.mxu0 0.0
    %90 = vmatprep.subr.mxu0 0.0
    %91 = vmatpush2.msra.mxu0 0.0
    %92 = vmatprep.subr.mxu0 0.0
    %93 = vmatpush2.msra.mxu0 0.0
    %94 = vmatprep.mubr.f32.mxu0 0.0
    %95 = vmatmul.mubr.f32.gmra.mxu0 %v12
    %v96 = vpop.f32.mrf.mxu0
    %v97 = vadd.f32 0.0, %v96
    %v98 = vpop.f32.mrf.mxu0
    %99 = vmatprep.mubr.f32.mxu0 0.0
    %100 = vmatmul.mubr.f32.gmra.mxu0 %v13
    %v101 = vpop.f32.mrf.mxu0
    %v102 = vadd.f32 0.0, %v101
    %v103 = vpop.f32.mrf.mxu0
    %104 = vdwg.mxu0
    %v105 = vmul.f32 %v97, 0.1
    %v106 = vmul.f32 %v102, 0.1
    %v107 = vmul.f32 %v105, %v12
    %v108 = vmul.f32 %v106, %v13
    %109 = vst [vmem:[#allocation2] sm:$0xff] %v107
    %110 = vst [vmem:[#allocation2 + $0x8] sm:$0xff] %v108
    // Predicated region
    $region10: #{bilinear_forward.1} parent=1 // pred_check
      _
    $region11: #{bilinear_forward.1} parent=1 // pred_check_branch
      %112 = sbr.rel (0) target = $region13
    $region12: #{bilinear_forward.1} parent=1 // pred_region
      %s114 = ssub.s32 256, 256
      %115 = vsyncadd [#allocation3], %s114
      %s116 = sshll.u32 [#allocation2], 4
      %s117 = int_to_ptr.vmem [resolvable:$true] %s116
      %122 = dma.vmem_to_hbm [thread:$0]  %s117, 256, %s2, [#allocation3], 128, 128, 8
    $region13: #{bilinear_forward.1} parent=1 // pred_fallthru
      _
    // Predicated region
    $region14: #{bilinear_forward.1} parent=1 // pred_check
      _
    $region15: #{bilinear_forward.1} parent=1 // pred_check_branch
      %124 = sbr.rel (0) target = $region17
    $region16: #{bilinear_forward.1} parent=1 // pred_region
      %125 = dma.done [#allocation3], 256
    $region17: #{bilinear_forward.1} parent=1 // pred_fallthru
      _
    %126 = vsyncpa [#allocation3], 1

</llo_original>
